<compile_context>
chip_gen: v6e
topology: v6e:2x2x1
jax: 0.10.0
libtpu: 0.0.40
codegen_flags: <defaults>
</compile_context>

<pallas_src>
import functools

import jax
import jax.numpy as jnp
from jax.experimental import pallas as pl
from jax.experimental.pallas import tpu as pltpu


# --------------------------------------------------------------------------
# Fused kernel: fc1 + ReLU + fc2 + ReLU + fc3 on one batch tile.
# --------------------------------------------------------------------------
def _race_branch_kernel(x_ref, w1_ref, w2_ref, w3_ref, o_ref):
    # x_ref: (bm, 512) f32; w1/w2: bf16 (in, out); w3: f32 (256, 128 lane-padded)
    x = x_ref[...].astype(jnp.bfloat16)

    h1 = jnp.dot(x, w1_ref[...], preferred_element_type=jnp.float32)
    # TODO(synk): F.dropout(training=True) is stochastic; eval-mode identity used.
    # ReLU in f32 before the downcast (safe on v5e, which has no bf16 VPU).
    h1 = jnp.maximum(h1, 0.0).astype(jnp.bfloat16)

    h2 = jnp.dot(h1, w2_ref[...], preferred_element_type=jnp.float32)
    h2 = jnp.maximum(h2, 0.0)

    # Final layer in f32 for tighter logits; (bm,256) x (256,128) lane-dense out.
    o_ref[...] = jnp.dot(h2, w3_ref[...], preferred_element_type=jnp.float32)


def race_branch_forward(x, w1_bf16, w2_bf16, w3_pad, *, num_classes=3, block_m=None):
    """x: (N, 512) f32; w1_bf16: (512, 512); w2_bf16: (512, 256);
    w3_pad: (256, 128) f32 zero-padded along the lane dim."""
    N, din = x.shape
    d1 = w1_bf16.shape[1]
    d2 = w2_bf16.shape[1]
    nc_pad = w3_pad.shape[1]
    assert w1_bf16.shape == (din, d1)
    assert w2_bf16.shape == (d1, d2)
    assert w3_pad.shape == (d2, nc_pad)
    assert num_classes <= nc_pad

    # Single grid step for small batches (serial grid => extra steps only add
    # ~0.35 us/step of pipeline overhead here). If block_m is ever raised for
    # large batches, keep it <= ~128 to avoid vreg pressure from the two live
    # f32 intermediates (or move h1/h2 into VMEM scratch).
    bm = N if block_m is None else min(block_m, N)
    assert N % bm == 0, "batch must be divisible by the row tile"
    grid_m = N // bm

    out_pad = pl.pallas_call(
        _race_branch_kernel,
        out_shape=jax.ShapeDtypeStruct((N, nc_pad), jnp.float32),
        grid=(grid_m,),
        in_specs=[
            pl.BlockSpec((bm, din), lambda i: (i, 0)),
            # Weight index_maps are constant across the grid -> no re-DMA.
            pl.BlockSpec((din, d1), lambda i: (0, 0)),
            pl.BlockSpec((d1, d2), lambda i: (0, 0)),
            pl.BlockSpec((d2, nc_pad), lambda i: (0, 0)),
        ],
        out_specs=pl.BlockSpec((bm, nc_pad), lambda i: (i, 0)),
        compiler_params=pltpu.CompilerParams(
            dimension_semantics=("arbitrary",),
        ),
    )(x, w1_bf16, w2_bf16, w3_pad)

    return out_pad[:, :num_classes]


# --------------------------------------------------------------------------
# Parameters.
#   * PyTorch's nn.Linear(in, out).weight is (out, in) and applies x @ W.T;
#     here weights are stored as (in, out) — same math.
#   * prepare_params does the one-time dtype cast / lane padding so the
#     per-call wrapper passes arrays straight into pallas_call.
# --------------------------------------------------------------------------
def init_params(key, num_classes=3):
    k1, k2, k3 = jax.random.split(key, 3)
    w1 = (1.0 / 512) ** 0.5 * jax.random.normal(k1, (512, 512), jnp.float32)
    w2 = (1.0 / 512) ** 0.5 * jax.random.normal(k2, (512, 256), jnp.float32)
    w3 = (1.0 / 256) ** 0.5 * jax.random.normal(k3, (256, num_classes), jnp.float32)
    return w1, w2, w3


def prepare_params(w1, w2, w3, *, lane_pad=128):
    """One-time conversion: bf16 MXU weights for fc1/fc2, lane-padded f32 fc3."""
    nc = w3.shape[1]
    assert nc <= lane_pad
    w3_pad = jnp.zeros((w3.shape[0], lane_pad), jnp.float32).at[:, :nc].set(w3)
    return w1.astype(jnp.bfloat16), w2.astype(jnp.bfloat16), w3_pad


def _reference_forward(x, w1, w2, w3):
    h1 = jnp.maximum(x @ w1, 0.0)
    h2 = jnp.maximum(h1 @ w2, 0.0)
    return h2 @ w3


if __name__ == "__main__":
    num_classes = 3
    key = jax.random.PRNGKey(0)
    pkey, xkey = jax.random.split(key)
    w1, w2, w3 = init_params(pkey, num_classes=num_classes)
    w1_bf16, w2_bf16, w3_pad = prepare_params(w1, w2, w3)

    # The module's FC stack fixes the feature dim at 512; batch=16 gives a
    # single sublane/lane-aligned (16, 512) row tile (bf16 sublane packing 16).
    x = jax.random.normal(xkey, (16, 512), jnp.float32)

    fwd = jax.jit(functools.partial(race_branch_forward, num_classes=num_classes))
    out = fwd(x, w1_bf16, w2_bf16, w3_pad)
    out = jax.block_until_ready(out)

    assert out.shape == (16, num_classes) and out.dtype == jnp.float32
    ref = _reference_forward(x, w1, w2, w3)
    # bf16 fc1/fc2 inputs with f32 accumulation -> loose tolerance vs f32 ref.
    assert jnp.allclose(out, ref, atol=0.3, rtol=0.05), "mismatch vs f32 reference"
    print("KERNEL_OK")
</pallas_src>

<mosaic_0001>
module attributes {stable_mosaic.version = 11 : i64} {
  func.func @_race_branch_kernel(%arg0: i32, %arg1: memref<16x512xf32, #tpu.memory_space<vmem>>, %arg2: memref<512x512xbf16, #tpu.memory_space<vmem>>, %arg3: memref<512x256xbf16, #tpu.memory_space<vmem>>, %arg4: memref<256x128xf32, #tpu.memory_space<vmem>>, %arg5: memref<16x128xf32, #tpu.memory_space<vmem>>) attributes {dimension_semantics = [#tpu.dimension_semantics<arbitrary>], iteration_bounds = array<i64: 1>, scalar_prefetch = 0 : i64, scratch_operands = 0 : i64, tpu.core_type = #tpu.core_type<tc>, window_params = [{transform_indices = @transform_0, window_bounds = array<i64: 16, 512>}, {pipeline_mode = #tpu.pipeline_mode<synchronous>, transform_indices = @transform_1, window_bounds = array<i64: 512, 512>}, {pipeline_mode = #tpu.pipeline_mode<synchronous>, transform_indices = @transform_2, window_bounds = array<i64: 512, 256>}, {pipeline_mode = #tpu.pipeline_mode<synchronous>, transform_indices = @transform_3, window_bounds = array<i64: 256, 128>}, {transform_indices = @transform_4, window_bounds = array<i64: 16, 128>}]} {
    %c0 = arith.constant 0 : index
    %c0_0 = arith.constant 0 : index
    %0 = vector.load %arg1[%c0, %c0_0] : memref<16x512xf32, #tpu.memory_space<vmem>>, vector<16x512xf32>
    %1 = arith.truncf %0 : vector<16x512xf32> to vector<16x512xbf16>
    %c0_1 = arith.constant 0 : index
    %c0_2 = arith.constant 0 : index
    %2 = vector.load %arg2[%c0_1, %c0_2] : memref<512x512xbf16, #tpu.memory_space<vmem>>, vector<512x512xbf16>
    %cst = arith.constant dense<0.000000e+00> : vector<16x512xf32>
    %3 = tpu.matmul %1, %2, %cst {dimension_numbers = #tpu.dot_dimension_numbers<[1], [0], [0], [1], [0, 0, 1, 1], [], []>} : vector<16x512xbf16>, vector<512x512xbf16>, vector<16x512xf32> -> vector<16x512xf32>
    %cst_3 = arith.constant 0.000000e+00 : f32
    %4 = vector.broadcast %cst_3 : f32 to vector<16x512xf32>
    %5 = arith.maximumf %3, %4 : vector<16x512xf32>
    %6 = arith.truncf %5 : vector<16x512xf32> to vector<16x512xbf16>
    %c0_4 = arith.constant 0 : index
    %c0_5 = arith.constant 0 : index
    %7 = vector.load %arg3[%c0_4, %c0_5] : memref<512x256xbf16, #tpu.memory_space<vmem>>, vector<512x256xbf16>
    %cst_6 = arith.constant dense<0.000000e+00> : vector<16x256xf32>
    %8 = tpu.matmul %6, %7, %cst_6 {dimension_numbers = #tpu.dot_dimension_numbers<[1], [0], [0], [1], [0, 0, 1, 1], [], []>} : vector<16x512xbf16>, vector<512x256xbf16>, vector<16x256xf32> -> vector<16x256xf32>
    %cst_7 = arith.constant 0.000000e+00 : f32
    %9 = vector.broadcast %cst_7 : f32 to vector<16x256xf32>
    %10 = arith.maximumf %8, %9 : vector<16x256xf32>
    %c0_8 = arith.constant 0 : index
    %c0_9 = arith.constant 0 : index
    %11 = vector.load %arg4[%c0_8, %c0_9] : memref<256x128xf32, #tpu.memory_space<vmem>>, vector<256x128xf32>
    %cst_10 = arith.constant dense<0.000000e+00> : vector<16x128xf32>
    %12 = tpu.matmul %10, %11, %cst_10 {dimension_numbers = #tpu.dot_dimension_numbers<[1], [0], [0], [1], [0, 0, 1, 1], [], []>} : vector<16x256xf32>, vector<256x128xf32>, vector<16x128xf32> -> vector<16x128xf32>
    %c0_11 = arith.constant 0 : index
    %c0_12 = arith.constant 0 : index
    %13 = vector.load %arg5[%c0_11, %c0_12] : memref<16x128xf32, #tpu.memory_space<vmem>>, vector<16x128xf32>
    tpu.vector_store %arg5[%c0_11, %c0_12], %12 {strides = array<i32>} : memref<16x128xf32, #tpu.memory_space<vmem>>, vector<16x128xf32>,
    return
  }
  func.func @transform_0(%arg0: i32) -> (i32, i32) {
    %c0_i32 = arith.constant 0 : i32
    %c0_i32_0 = arith.constant 0 : i32
    return %arg0, %c0_i32 : i32, i32
  }
  func.func @transform_1(%arg0: i32) -> (i32, i32) {
    %c0_i32 = arith.constant 0 : i32
    %c0_i32_0 = arith.constant 0 : i32
    %c0_i32_1 = arith.constant 0 : i32
    return %c0_i32, %c0_i32_0 : i32, i32
  }
  func.func @transform_2(%arg0: i32) -> (i32, i32) {
    %c0_i32 = arith.constant 0 : i32
    %c0_i32_0 = arith.constant 0 : i32
    %c0_i32_1 = arith.constant 0 : i32
    return %c0_i32, %c0_i32_0 : i32, i32
  }
  func.func @transform_3(%arg0: i32) -> (i32, i32) {
    %c0_i32 = arith.constant 0 : i32
    %c0_i32_0 = arith.constant 0 : i32
    %c0_i32_1 = arith.constant 0 : i32
    return %c0_i32, %c0_i32_0 : i32, i32
  }
  func.func @transform_4(%arg0: i32) -> (i32, i32) {
    %c0_i32 = arith.constant 0 : i32
    %c0_i32_0 = arith.constant 0 : i32
    return %arg0, %c0_i32 : i32, i32
  }
}

</mosaic_0001>

<llo_original>
// kernel: race_branch_forward.1
$region0: #{race_branch_forward.1}
  #allocation0 [shape = 'u32[]', space=smem, size = 0x4, offset = 0x4, fixed_abs, tag = 'smem constant byte address 0x4 - core index']
  #allocation1 [shape = 'u32[144,128]{1,0:T(1,128)}', space=vmem, size = 0x12000, scoped, tag = 'internal scratch']
  %s0 = inlined_call_operand.hbm [shape: f32[16,512], index: 0, kind: input, shape index: {}]
  %s1 = inlined_call_operand.hbm [shape: bf16[512,512], index: 1, kind: input, shape index: {}]
  %s2 = inlined_call_operand.hbm [shape: bf16[512,256], index: 2, kind: input, shape index: {}]
  %s3 = inlined_call_operand.hbm [shape: f32[256,128], index: 3, kind: input, shape index: {}]
  %s4 = inlined_call_operand.vmem [shape: f32[16,128], index: 4, kind: output, shape index: {}]
  %s5 = sld [smem:[#allocation0]]
  $region42: #{race_branch_forward.1} parent=0
    _
  %s7 = ssub.s32 1, %s5
  %s8 = scalar_select 0, %s7, %s5
  $region1: #{race_branch_forward.1} parent=0
    #allocation2 [shape = 'u8[32768]{0}', space=vmem, size = 0x8000, scoped, tag = 'input window, operand 0, single buffered']
    #allocation3 [shape = 's32[1]{0}', space=sflag, size = 0x4, scoped, tag = 'scoped memory for race_branch_forward.1']
    #allocation4 [shape = 'u8[524288]{0}', space=vmem, size = 0x80000, scoped, tag = 'input window, operand 1, single buffered']
    #allocation5 [shape = 's32[1]{0}', space=sflag, size = 0x4, scoped, tag = 'scoped memory for race_branch_forward.1']
    #allocation6 [shape = 'u8[262144]{0}', space=vmem, size = 0x40000, scoped, tag = 'input window, operand 2, single buffered']
    #allocation7 [shape = 'u8[131072]{0}', space=vmem, size = 0x20000, scoped, tag = 'input window, operand 3, single buffered']
    #allocation8 [shape = 's32[1]{0}', space=sflag, size = 0x4, scoped, tag = 'scoped memory for race_branch_forward.1']
    %9 = vsyncpa [#allocation3], 0
    %10 = vsyncpa [#allocation5], 0
    %11 = vsyncpa [#allocation8], 0
    // Predicated region
    $region2: #{race_branch_forward.1} parent=1 // pred_check
      _
    $region3: #{race_branch_forward.1} parent=1 // pred_check_branch
      %13 = sbr.rel (0) target = $region5
    $region4: #{race_branch_forward.1} parent=1 // pred_region
      %s15 = ssub.s32 1024, 1024
      %16 = vsyncadd [#allocation3], %s15
      %s17 = sshll.u32 [#allocation2], 4
      %s18 = int_to_ptr.vmem [resolvable:$true] %s17
      %23 = dma.hbm_to_vmem [thread:$0]  %s0, 1024, %s18, [#allocation3], 512, 512, 32
    $region5: #{race_branch_forward.1} parent=1 // pred_fallthru
      _
    // Predicated region
    $region6: #{race_branch_forward.1} parent=1 // pred_check
      _
    $region7: #{race_branch_forward.1} parent=1 // pred_check_branch
      %25 = sbr.rel (0) target = $region9
    $region8: #{race_branch_forward.1} parent=1 // pred_region
      %s27 = ssub.s32 16384, 16384
      %28 = vsyncadd [#allocation5], %s27
      %s29 = sshll.u32 [#allocation4], 4
      %s30 = int_to_ptr.vmem [resolvable:$true] %s29
      %35 = dma.hbm_to_vmem [thread:$0]  %s1, 16384, %s30, [#allocation5], 256, 256, 16
    $region9: #{race_branch_forward.1} parent=1 // pred_fallthru
      _
    // Predicated region
    $region10: #{race_branch_forward.1} parent=1 // pred_check
      _
    $region11: #{race_branch_forward.1} parent=1 // pred_check_branch
      %37 = sbr.rel (0) target = $region13
    $region12: #{race_branch_forward.1} parent=1 // pred_region
      %s39 = ssub.s32 8192, 8192
      %40 = vsyncadd [#allocation5], %s39
      %s41 = sshll.u32 [#allocation6], 4
      %s42 = int_to_ptr.vmem [resolvable:$true] %s41
      %47 = dma.hbm_to_vmem [thread:$0]  %s2, 8192, %s42, [#allocation5], 128, 128, 8
    $region13: #{race_branch_forward.1} parent=1 // pred_fallthru
      _
    // Predicated region
    $region14: #{race_branch_forward.1} parent=1 // pred_check
      _
    $region15: #{race_branch_forward.1} parent=1 // pred_check_branch
      %49 = sbr.rel (0) target = $region17
    $region16: #{race_branch_forward.1} parent=1 // pred_region
      %s51 = ssub.s32 4096, 4096
      %52 = vsyncadd [#allocation8], %s51
      %s53 = sshll.u32 [#allocation7], 4
      %s54 = int_to_ptr.vmem [resolvable:$true] %s53
      %59 = dma.hbm_to_vmem [thread:$0]  %s3, 4096, %s54, [#allocation8], 128, 128, 8
    $region17: #{race_branch_forward.1} parent=1 // pred_fallthru
      _
    // Predicated region
    $region18: #{race_branch_forward.1} parent=1 // pred_check
      _
    $region19: #{race_branch_forward.1} parent=1 // pred_check_branch
      %61 = sbr.rel (0) target = $region21
    $region20: #{race_branch_forward.1} parent=1 // pred_region
      %62 = dma.done [#allocation3], 1024
    $region21: #{race_branch_forward.1} parent=1 // pred_fallthru
      _
    // Predicated region
    $region22: #{race_branch_forward.1} parent=1 // pred_check
      _
    $region23: #{race_branch_forward.1} parent=1 // pred_check_branch
      %64 = sbr.rel (0) target = $region25
    $region24: #{race_branch_forward.1} parent=1 // pred_region
      %65 = dma.done [#allocation5], 16384
    $region25: #{race_branch_forward.1} parent=1 // pred_fallthru
      _
    // Predicated region
    $region26: #{race_branch_forward.1} parent=1 // pred_check
      _
    $region27: #{race_branch_forward.1} parent=1 // pred_check_branch
      %67 = sbr.rel (0) target = $region29
    $region28: #{race_branch_forward.1} parent=1 // pred_region
      %68 = dma.done [#allocation5], 8192
    $region29: #{race_branch_forward.1} parent=1 // pred_fallthru
      _
    // Predicated region
    $region30: #{race_branch_forward.1} parent=1 // pred_check
      _
    $region31: #{race_branch_forward.1} parent=1 // pred_check_branch
      %70 = sbr.rel (0) target = $region33
    $region32: #{race_branch_forward.1} parent=1 // pred_region
      %71 = dma.done [#allocation8], 4096
    $region33: #{race_branch_forward.1} parent=1 // pred_fallthru
      _
    %v72 = vld [vmem:[#allocation2] sm:$0xff]
    %v73 = vld [vmem:[#allocation2 + $0x8] sm:$0xff]
    %v74 = vld [vmem:[#allocation2 + $0x10] sm:$0xff]
    %v75 = vld [vmem:[#allocation2 + $0x18] sm:$0xff]
    %v76 = vld [vmem:[#allocation2 + $0x20] sm:$0xff]
    %v77 = vld [vmem:[#allocation2 + $0x28] sm:$0xff]
    %v78 = vld [vmem:[#allocation2 + $0x30] sm:$0xff]
    %v79 = vld [vmem:[#allocation2 + $0x38] sm:$0xff]
    %v80 = vpack.c.bf16 %v76, %v72
    %v81 = vpack.c.bf16 %v77, %v73
    %v82 = vpack.c.bf16 %v78, %v74
    %v83 = vpack.c.bf16 %v79, %v75
    %v84 = vld [vmem:[#allocation4] sm:$0xff]
    %v85 = vld [vmem:[#allocation4 + $0x8] sm:$0xff]
    %v86 = vld [vmem:[#allocation4 + $0x10] sm:$0xff]
    %v87 = vld [vmem:[#allocation4 + $0x18] sm:$0xff]
    %v88 = vld [vmem:[#allocation4 + $0x20] sm:$0xff]
    %v89 = vld [vmem:[#allocation4 + $0x28] sm:$0xff]
    %v90 = vld [vmem:[#allocation4 + $0x30] sm:$0xff]
    %v91 = vld [vmem:[#allocation4 + $0x38] sm:$0xff]
    %v92 = vld [vmem:[#allocation4 + $0x40] sm:$0xff]
    %v93 = vld [vmem:[#allocation4 + $0x48] sm:$0xff]
    %v94 = vld [vmem:[#allocation4 + $0x50] sm:$0xff]
    %v95 = vld [vmem:[#allocation4 + $0x58] sm:$0xff]
    %v96 = vld [vmem:[#allocation4 + $0x60] sm:$0xff]
    %v97 = vld [vmem:[#allocation4 + $0x68] sm:$0xff]
    %v98 = vld [vmem:[#allocation4 + $0x70] sm:$0xff]
    %v99 = vld [vmem:[#allocation4 + $0x78] sm:$0xff]
    %v100 = vld [vmem:[#allocation4 + $0x80] sm:$0xff]
    %v101 = vld [vmem:[#allocation4 + $0x88] sm:$0xff]
    %v102 = vld [vmem:[#allocation4 + $0x90] sm:$0xff]
    %v103 = vld [vmem:[#allocation4 + $0x98] sm:$0xff]
    %v104 = vld [vmem:[#allocation4 + $0xa0] sm:$0xff]
    %v105 = vld [vmem:[#allocation4 + $0xa8] sm:$0xff]
    %v106 = vld [vmem:[#allocation4 + $0xb0] sm:$0xff]
    %v107 = vld [vmem:[#allocation4 + $0xb8] sm:$0xff]
    %v108 = vld [vmem:[#allocation4 + $0xc0] sm:$0xff]
    %v109 = vld [vmem:[#allocation4 + $0xc8] sm:$0xff]
    %v110 = vld [vmem:[#allocation4 + $0xd0] sm:$0xff]
    %v111 = vld [vmem:[#allocation4 + $0xd8] sm:$0xff]
    %v112 = vld [vmem:[#allocation4 + $0xe0] sm:$0xff]
    %v113 = vld [vmem:[#allocation4 + $0xe8] sm:$0xff]
    %v114 = vld [vmem:[#allocation4 + $0xf0] sm:$0xff]
    %v115 = vld [vmem:[#allocation4 + $0xf8] sm:$0xff]
    %v116 = vld [vmem:[#allocation4 + $0x100] sm:$0xff]
    %v117 = vld [vmem:[#allocation4 + $0x108] sm:$0xff]
    %v118 = vld [vmem:[#allocation4 + $0x110] sm:$0xff]
    %v119 = vld [vmem:[#allocation4 + $0x118] sm:$0xff]
    %v120 = vld [vmem:[#allocation4 + $0x120] sm:$0xff]
    %v121 = vld [vmem:[#allocation4 + $0x128] sm:$0xff]
    %v122 = vld [vmem:[#allocation4 + $0x130] sm:$0xff]
    %v123 = vld [vmem:[#allocation4 + $0x138] sm:$0xff]
    %v124 = vld [vmem:[#allocation4 + $0x140] sm:$0xff]
    %v125 = vld [vmem:[#allocation4 + $0x148] sm:$0xff]
    %v126 = vld [vmem:[#allocation4 + $0x150] sm:$0xff]
    %v127 = vld [vmem:[#allocation4 + $0x158] sm:$0xff]
    %v128 = vld [vmem:[#allocation4 + $0x160] sm:$0xff]
    %v129 = vld [vmem:[#allocation4 + $0x168] sm:$0xff]
    %v130 = vld [vmem:[#allocation4 + $0x170] sm:$0xff]
    %v131 = vld [vmem:[#allocation4 + $0x178] sm:$0xff]
    %v132 = vld [vmem:[#allocation4 + $0x180] sm:$0xff]
    %v133 = vld [vmem:[#allocation4 + $0x188] sm:$0xff]
    %v134 = vld [vmem:[#allocation4 + $0x190] sm:$0xff]
    %v135 = vld [vmem:[#allocation4 + $0x198] sm:$0xff]
    %v136 = vld [vmem:[#allocation4 + $0x1a0] sm:$0xff]
    %v137 = vld [vmem:[#allocation4 + $0x1a8] sm:$0xff]
    %v138 = vld [vmem:[#allocation4 + $0x1b0] sm:$0xff]
    %v139 = vld [vmem:[#allocation4 + $0x1b8] sm:$0xff]
    %v140 = vld [vmem:[#allocation4 + $0x1c0] sm:$0xff]
    %v141 = vld [vmem:[#allocation4 + $0x1c8] sm:$0xff]
    %v142 = vld [vmem:[#allocation4 + $0x1d0] sm:$0xff]
    %v143 = vld [vmem:[#allocation4 + $0x1d8] sm:$0xff]
    %v144 = vld [vmem:[#allocation4 + $0x1e0] sm:$0xff]
    %v145 = vld [vmem:[#allocation4 + $0x1e8] sm:$0xff]
    %v146 = vld [vmem:[#allocation4 + $0x1f0] sm:$0xff]
    %v147 = vld [vmem:[#allocation4 + $0x1f8] sm:$0xff]
    %v148 = vld [vmem:[#allocation4 + $0x200] sm:$0xff]
    %v149 = vld [vmem:[#allocation4 + $0x208] sm:$0xff]
    %v150 = vld [vmem:[#allocation4 + $0x210] sm:$0xff]
    %v151 = vld [vmem:[#allocation4 + $0x218] sm:$0xff]
    %v152 = vld [vmem:[#allocation4 + $0x220] sm:$0xff]
    %v153 = vld [vmem:[#allocation4 + $0x228] sm:$0xff]
    %v154 = vld [vmem:[#allocation4 + $0x230] sm:$0xff]
    %v155 = vld [vmem:[#allocation4 + $0x238] sm:$0xff]
    %v156 = vld [vmem:[#allocation4 + $0x240] sm:$0xff]
    %v157 = vld [vmem:[#allocation4 + $0x248] sm:$0xff]
    %v158 = vld [vmem:[#allocation4 + $0x250] sm:$0xff]
    %v159 = vld [vmem:[#allocation4 + $0x258] sm:$0xff]
    %v160 = vld [vmem:[#allocation4 + $0x260] sm:$0xff]
    %v161 = vld [vmem:[#allocation4 + $0x268] sm:$0xff]
    %v162 = vld [vmem:[#allocation4 + $0x270] sm:$0xff]
    %v163 = vld [vmem:[#allocation4 + $0x278] sm:$0xff]
    %v164 = vld [vmem:[#allocation4 + $0x280] sm:$0xff]
    %v165 = vld [vmem:[#allocation4 + $0x288] sm:$0xff]
    %v166 = vld [vmem:[#allocation4 + $0x290] sm:$0xff]
    %v167 = vld [vmem:[#allocation4 + $0x298] sm:$0xff]
    %v168 = vld [vmem:[#allocation4 + $0x2a0] sm:$0xff]
    %v169 = vld [vmem:[#allocation4 + $0x2a8] sm:$0xff]
    %v170 = vld [vmem:[#allocation4 + $0x2b0] sm:$0xff]
    %v171 = vld [vmem:[#allocation4 + $0x2b8] sm:$0xff]
    %v172 = vld [vmem:[#allocation4 + $0x2c0] sm:$0xff]
    %v173 = vld [vmem:[#allocation4 + $0x2c8] sm:$0xff]
    %v174 = vld [vmem:[#allocation4 + $0x2d0] sm:$0xff]
    %v175 = vld [vmem:[#allocation4 + $0x2d8] sm:$0xff]
    %v176 = vld [vmem:[#allocation4 + $0x2e0] sm:$0xff]
    %v177 = vld [vmem:[#allocation4 + $0x2e8] sm:$0xff]
    %v178 = vld [vmem:[#allocation4 + $0x2f0] sm:$0xff]
    %v179 = vld [vmem:[#allocation4 + $0x2f8] sm:$0xff]
    %v180 = vld [vmem:[#allocation4 + $0x300] sm:$0xff]
    %v181 = vld [vmem:[#allocation4 + $0x308] sm:$0xff]
    %v182 = vld [vmem:[#allocation4 + $0x310] sm:$0xff]
    %v183 = vld [vmem:[#allocation4 + $0x318] sm:$0xff]
    %v184 = vld [vmem:[#allocation4 + $0x320] sm:$0xff]
    %v185 = vld [vmem:[#allocation4 + $0x328] sm:$0xff]
    %v186 = vld [vmem:[#allocation4 + $0x330] sm:$0xff]
    %v187 = vld [vmem:[#allocation4 + $0x338] sm:$0xff]
    %v188 = vld [vmem:[#allocation4 + $0x340] sm:$0xff]
    %v189 = vld [vmem:[#allocation4 + $0x348] sm:$0xff]
    %v190 = vld [vmem:[#allocation4 + $0x350] sm:$0xff]
    %v191 = vld [vmem:[#allocation4 + $0x358] sm:$0xff]
    %v192 = vld [vmem:[#allocation4 + $0x360] sm:$0xff]
    %v193 = vld [vmem:[#allocation4 + $0x368] sm:$0xff]
    %v194 = vld [vmem:[#allocation4 + $0x370] sm:$0xff]
    %v195 = vld [vmem:[#allocation4 + $0x378] sm:$0xff]
    %v196 = vld [vmem:[#allocation4 + $0x380] sm:$0xff]
    %v197 = vld [vmem:[#allocation4 + $0x388] sm:$0xff]
    %v198 = vld [vmem:[#allocation4 + $0x390] sm:$0xff]
    %v199 = vld [vmem:[#allocation4 + $0x398] sm:$0xff]
    %v200 = vld [vmem:[#allocation4 + $0x3a0] sm:$0xff]
    %v201 = vld [vmem:[#allocation4 + $0x3a8] sm:$0xff]
    %v202 = vld [vmem:[#allocation4 + $0x3b0] sm:$0xff]
    %v203 = vld [vmem:[#allocation4 + $0x3b8] sm:$0xff]
    %v204 = vld [vmem:[#allocation4 + $0x3c0] sm:$0xff]
    %v205 = vld [vmem:[#allocation4 + $0x3c8] sm:$0xff]
    %v206 = vld [vmem:[#allocation4 + $0x3d0] sm:$0xff]
    %v207 = vld [vmem:[#allocation4 + $0x3d8] sm:$0xff]
    %v208 = vld [vmem:[#allocation4 + $0x3e0] sm:$0xff]
    %v209 = vld [vmem:[#allocation4 + $0x3e8] sm:$0xff]
    %v210 = vld [vmem:[#allocation4 + $0x3f0] sm:$0xff]
    %v211 = vld [vmem:[#allocation4 + $0x3f8] sm:$0xff]
    %v340 = vunpack.c.l.b16 %v84
    %v341 = vunpack.c.h.b16 %v84
    %v342 = vunpack.c.l.b16 %v85
    %v343 = vunpack.c.h.b16 %v85
    %v344 = vunpack.c.l.b16 %v86
    %v345 = vunpack.c.h.b16 %v86
    %v346 = vunpack.c.l.b16 %v87
    %v347 = vunpack.c.h.b16 %v87
    %v348 = vunpack.c.l.b16 %v88
    %v349 = vunpack.c.h.b16 %v88
    %v350 = vunpack.c.l.b16 %v89
    %v351 = vunpack.c.h.b16 %v89
    %v352 = vunpack.c.l.b16 %v90
    %v353 = vunpack.c.h.b16 %v90
    %v354 = vunpack.c.l.b16 %v91
    %v355 = vunpack.c.h.b16 %v91
    %v356 = vunpack.c.l.b16 %v92
    %v357 = vunpack.c.h.b16 %v92
    %v358 = vunpack.c.l.b16 %v93
    %v359 = vunpack.c.h.b16 %v93
    %v360 = vunpack.c.l.b16 %v94
    %v361 = vunpack.c.h.b16 %v94
    %v362 = vunpack.c.l.b16 %v95
    %v363 = vunpack.c.h.b16 %v95
    %v364 = vunpack.c.l.b16 %v96
    %v365 = vunpack.c.h.b16 %v96
    %v366 = vunpack.c.l.b16 %v97
    %v367 = vunpack.c.h.b16 %v97
    %v368 = vunpack.c.l.b16 %v98
    %v369 = vunpack.c.h.b16 %v98
    %v370 = vunpack.c.l.b16 %v99
    %v371 = vunpack.c.h.b16 %v99
    %v372 = vunpack.c.l.b16 %v100
    %v373 = vunpack.c.h.b16 %v100
    %v374 = vunpack.c.l.b16 %v101
    %v375 = vunpack.c.h.b16 %v101
    %v376 = vunpack.c.l.b16 %v102
    %v377 = vunpack.c.h.b16 %v102
    %v378 = vunpack.c.l.b16 %v103
    %v379 = vunpack.c.h.b16 %v103
    %v380 = vunpack.c.l.b16 %v104
    %v381 = vunpack.c.h.b16 %v104
    %v382 = vunpack.c.l.b16 %v105
    %v383 = vunpack.c.h.b16 %v105
    %v384 = vunpack.c.l.b16 %v106
    %v385 = vunpack.c.h.b16 %v106
    %v386 = vunpack.c.l.b16 %v107
    %v387 = vunpack.c.h.b16 %v107
    %v388 = vunpack.c.l.b16 %v108
    %v389 = vunpack.c.h.b16 %v108
    %v390 = vunpack.c.l.b16 %v109
    %v391 = vunpack.c.h.b16 %v109
    %v392 = vunpack.c.l.b16 %v110
    %v393 = vunpack.c.h.b16 %v110
    %v394 = vunpack.c.l.b16 %v111
    %v395 = vunpack.c.h.b16 %v111
    %v396 = vunpack.c.l.b16 %v112
    %v397 = vunpack.c.h.b16 %v112
    %v398 = vunpack.c.l.b16 %v113
    %v399 = vunpack.c.h.b16 %v113
    %v400 = vunpack.c.l.b16 %v114
    %v401 = vunpack.c.h.b16 %v114
    %v402 = vunpack.c.l.b16 %v115
    %v403 = vunpack.c.h.b16 %v115
    %v404 = vunpack.c.l.b16 %v116
    %v405 = vunpack.c.h.b16 %v116
    %v406 = vunpack.c.l.b16 %v117
    %v407 = vunpack.c.h.b16 %v117
    %v408 = vunpack.c.l.b16 %v118
    %v409 = vunpack.c.h.b16 %v118
    %v410 = vunpack.c.l.b16 %v119
    %v411 = vunpack.c.h.b16 %v119
    %v412 = vunpack.c.l.b16 %v120
    %v413 = vunpack.c.h.b16 %v120
    %v414 = vunpack.c.l.b16 %v121
    %v415 = vunpack.c.h.b16 %v121
    %v416 = vunpack.c.l.b16 %v122
    %v417 = vunpack.c.h.b16 %v122
    %v418 = vunpack.c.l.b16 %v123
    %v419 = vunpack.c.h.b16 %v123
    %v420 = vunpack.c.l.b16 %v124
    %v421 = vunpack.c.h.b16 %v124
    %v422 = vunpack.c.l.b16 %v125
    %v423 = vunpack.c.h.b16 %v125
    %v424 = vunpack.c.l.b16 %v126
    %v425 = vunpack.c.h.b16 %v126
    %v426 = vunpack.c.l.b16 %v127
    %v427 = vunpack.c.h.b16 %v127
    %v428 = vunpack.c.l.b16 %v128
    %v429 = vunpack.c.h.b16 %v128
    %v430 = vunpack.c.l.b16 %v129
    %v431 = vunpack.c.h.b16 %v129
    %v432 = vunpack.c.l.b16 %v130
    %v433 = vunpack.c.h.b16 %v130
    %v434 = vunpack.c.l.b16 %v131
    %v435 = vunpack.c.h.b16 %v131
    %v436 = vunpack.c.l.b16 %v132
    %v437 = vunpack.c.h.b16 %v132
    %v438 = vunpack.c.l.b16 %v133
    %v439 = vunpack.c.h.b16 %v133
    %v440 = vunpack.c.l.b16 %v134
    %v441 = vunpack.c.h.b16 %v134
    %v442 = vunpack.c.l.b16 %v135
    %v443 = vunpack.c.h.b16 %v135
    %v444 = vunpack.c.l.b16 %v136
    %v445 = vunpack.c.h.b16 %v136
    %v446 = vunpack.c.l.b16 %v137
    %v447 = vunpack.c.h.b16 %v137
    %v448 = vunpack.c.l.b16 %v138
    %v449 = vunpack.c.h.b16 %v138
    %v450 = vunpack.c.l.b16 %v139
    %v451 = vunpack.c.h.b16 %v139
    %v452 = vunpack.c.l.b16 %v140
    %v453 = vunpack.c.h.b16 %v140
    %v454 = vunpack.c.l.b16 %v141
    %v455 = vunpack.c.h.b16 %v141
    %v456 = vunpack.c.l.b16 %v142
    %v457 = vunpack.c.h.b16 %v142
    %v458 = vunpack.c.l.b16 %v143
    %v459 = vunpack.c.h.b16 %v143
    %v460 = vunpack.c.l.b16 %v144
    %v461 = vunpack.c.h.b16 %v144
    %v462 = vunpack.c.l.b16 %v145
    %v463 = vunpack.c.h.b16 %v145
    %v464 = vunpack.c.l.b16 %v146
    %v465 = vunpack.c.h.b16 %v146
    %v466 = vunpack.c.l.b16 %v147
    %v467 = vunpack.c.h.b16 %v147
    %v468 = vunpack.c.l.b16 %v148
    %v469 = vunpack.c.h.b16 %v148
    %v470 = vunpack.c.l.b16 %v149
    %v471 = vunpack.c.h.b16 %v149
    %v472 = vunpack.c.l.b16 %v150
    %v473 = vunpack.c.h.b16 %v150
    %v474 = vunpack.c.l.b16 %v151
    %v475 = vunpack.c.h.b16 %v151
    %v476 = vunpack.c.l.b16 %v152
    %v477 = vunpack.c.h.b16 %v152
    %v478 = vunpack.c.l.b16 %v153
    %v479 = vunpack.c.h.b16 %v153
    %v480 = vunpack.c.l.b16 %v154
    %v481 = vunpack.c.h.b16 %v154
    %v482 = vunpack.c.l.b16 %v155
    %v483 = vunpack.c.h.b16 %v155
    %v484 = vunpack.c.l.b16 %v156
    %v485 = vunpack.c.h.b16 %v156
    %v486 = vunpack.c.l.b16 %v157
    %v487 = vunpack.c.h.b16 %v157
    %v488 = vunpack.c.l.b16 %v158
    %v489 = vunpack.c.h.b16 %v158
    %v490 = vunpack.c.l.b16 %v159
    %v491 = vunpack.c.h.b16 %v159
    %v492 = vunpack.c.l.b16 %v160
    %v493 = vunpack.c.h.b16 %v160
    %v494 = vunpack.c.l.b16 %v161
    %v495 = vunpack.c.h.b16 %v161
    %v496 = vunpack.c.l.b16 %v162
    %v497 = vunpack.c.h.b16 %v162
    %v498 = vunpack.c.l.b16 %v163
    %v499 = vunpack.c.h.b16 %v163
    %v500 = vunpack.c.l.b16 %v164
    %v501 = vunpack.c.h.b16 %v164
    %v502 = vunpack.c.l.b16 %v165
    %v503 = vunpack.c.h.b16 %v165
    %v504 = vunpack.c.l.b16 %v166
    %v505 = vunpack.c.h.b16 %v166
    %v506 = vunpack.c.l.b16 %v167
    %v507 = vunpack.c.h.b16 %v167
    %v508 = vunpack.c.l.b16 %v168
    %v509 = vunpack.c.h.b16 %v168
    %v510 = vunpack.c.l.b16 %v169
    %v511 = vunpack.c.h.b16 %v169
    %v512 = vunpack.c.l.b16 %v170
    %v513 = vunpack.c.h.b16 %v170
    %v514 = vunpack.c.l.b16 %v171
    %v515 = vunpack.c.h.b16 %v171
    %v516 = vunpack.c.l.b16 %v172
    %v517 = vunpack.c.h.b16 %v172
    %v518 = vunpack.c.l.b16 %v173
    %v519 = vunpack.c.h.b16 %v173
    %v520 = vunpack.c.l.b16 %v174
    %v521 = vunpack.c.h.b16 %v174
    %v522 = vunpack.c.l.b16 %v175
    %v523 = vunpack.c.h.b16 %v175
    %v524 = vunpack.c.l.b16 %v176
    %v525 = vunpack.c.h.b16 %v176
    %v526 = vunpack.c.l.b16 %v177
    %v527 = vunpack.c.h.b16 %v177
    %v528 = vunpack.c.l.b16 %v178
    %v529 = vunpack.c.h.b16 %v178
    %v530 = vunpack.c.l.b16 %v179
    %v531 = vunpack.c.h.b16 %v179
    %v532 = vunpack.c.l.b16 %v180
    %v533 = vunpack.c.h.b16 %v180
    %v534 = vunpack.c.l.b16 %v181
    %v535 = vunpack.c.h.b16 %v181
    %v536 = vunpack.c.l.b16 %v182
    %v537 = vunpack.c.h.b16 %v182
    %v538 = vunpack.c.l.b16 %v183
    %v539 = vunpack.c.h.b16 %v183
    %v540 = vunpack.c.l.b16 %v184
    %v541 = vunpack.c.h.b16 %v184
    %v542 = vunpack.c.l.b16 %v185
    %v543 = vunpack.c.h.b16 %v185
    %v544 = vunpack.c.l.b16 %v186
    %v545 = vunpack.c.h.b16 %v186
    %v546 = vunpack.c.l.b16 %v187
    %v547 = vunpack.c.h.b16 %v187
    %v548 = vunpack.c.l.b16 %v188
    %v549 = vunpack.c.h.b16 %v188
    %v550 = vunpack.c.l.b16 %v189
    %v551 = vunpack.c.h.b16 %v189
    %v552 = vunpack.c.l.b16 %v190
    %v553 = vunpack.c.h.b16 %v190
    %v554 = vunpack.c.l.b16 %v191
    %v555 = vunpack.c.h.b16 %v191
    %v556 = vunpack.c.l.b16 %v192
    %v557 = vunpack.c.h.b16 %v192
    %v558 = vunpack.c.l.b16 %v193
    %v559 = vunpack.c.h.b16 %v193
    %v560 = vunpack.c.l.b16 %v194
    %v561 = vunpack.c.h.b16 %v194
    %v562 = vunpack.c.l.b16 %v195
    %v563 = vunpack.c.h.b16 %v195
    %v564 = vunpack.c.l.b16 %v196
    %v565 = vunpack.c.h.b16 %v196
    %v566 = vunpack.c.l.b16 %v197
    %v567 = vunpack.c.h.b16 %v197
    %v568 = vunpack.c.l.b16 %v198
    %v569 = vunpack.c.h.b16 %v198
    %v570 = vunpack.c.l.b16 %v199
    %v571 = vunpack.c.h.b16 %v199
    %v572 = vunpack.c.l.b16 %v200
    %v573 = vunpack.c.h.b16 %v200
    %v574 = vunpack.c.l.b16 %v201
    %v575 = vunpack.c.h.b16 %v201
    %v576 = vunpack.c.l.b16 %v202
    %v577 = vunpack.c.h.b16 %v202
    %v578 = vunpack.c.l.b16 %v203
    %v579 = vunpack.c.h.b16 %v203
    %v580 = vunpack.c.l.b16 %v204
    %v581 = vunpack.c.h.b16 %v204
    %v582 = vunpack.c.l.b16 %v205
    %v583 = vunpack.c.h.b16 %v205
    %v584 = vunpack.c.l.b16 %v206
    %v585 = vunpack.c.h.b16 %v206
    %v586 = vunpack.c.l.b16 %v207
    %v587 = vunpack.c.h.b16 %v207
    %v588 = vunpack.c.l.b16 %v208
    %v589 = vunpack.c.h.b16 %v208
    %v590 = vunpack.c.l.b16 %v209
    %v591 = vunpack.c.h.b16 %v209
    %v592 = vunpack.c.l.b16 %v210
    %v593 = vunpack.c.h.b16 %v210
    %v594 = vunpack.c.l.b16 %v211
    %v595 = vunpack.c.h.b16 %v211
    %v596 = vpack.c.b16 %v344, %v340
    %v597 = vpack.c.b16 %v345, %v341
    %v598 = vpack.c.b16 %v346, %v342
    %v599 = vpack.c.b16 %v347, %v343
    %v600 = vpack.c.b16 %v352, %v348
    %v601 = vpack.c.b16 %v353, %v349
    %v602 = vpack.c.b16 %v354, %v350
    %v603 = vpack.c.b16 %v355, %v351
    %v604 = vpack.c.b16 %v360, %v356
    %v605 = vpack.c.b16 %v361, %v357
    %v606 = vpack.c.b16 %v362, %v358
    %v607 = vpack.c.b16 %v363, %v359
    %v608 = vpack.c.b16 %v368, %v364
    %v609 = vpack.c.b16 %v369, %v365
    %v610 = vpack.c.b16 %v370, %v366
    %v611 = vpack.c.b16 %v371, %v367
    %v612 = vpack.c.b16 %v376, %v372
    %v613 = vpack.c.b16 %v377, %v373
    %v614 = vpack.c.b16 %v378, %v374
    %v615 = vpack.c.b16 %v379, %v375
    %v616 = vpack.c.b16 %v384, %v380
    %v617 = vpack.c.b16 %v385, %v381
    %v618 = vpack.c.b16 %v386, %v382
    %v619 = vpack.c.b16 %v387, %v383
    %v620 = vpack.c.b16 %v392, %v388
    %v621 = vpack.c.b16 %v393, %v389
    %v622 = vpack.c.b16 %v394, %v390
    %v623 = vpack.c.b16 %v395, %v391
    %v624 = vpack.c.b16 %v400, %v396
    %v625 = vpack.c.b16 %v401, %v397
    %v626 = vpack.c.b16 %v402, %v398
    %v627 = vpack.c.b16 %v403, %v399
    %v628 = vpack.c.b16 %v408, %v404
    %v629 = vpack.c.b16 %v409, %v405
    %v630 = vpack.c.b16 %v410, %v406
    %v631 = vpack.c.b16 %v411, %v407
    %v632 = vpack.c.b16 %v416, %v412
    %v633 = vpack.c.b16 %v417, %v413
    %v634 = vpack.c.b16 %v418, %v414
    %v635 = vpack.c.b16 %v419, %v415
    %v636 = vpack.c.b16 %v424, %v420
    %v637 = vpack.c.b16 %v425, %v421
    %v638 = vpack.c.b16 %v426, %v422
    %v639 = vpack.c.b16 %v427, %v423
    %v640 = vpack.c.b16 %v432, %v428
    %v641 = vpack.c.b16 %v433, %v429
    %v642 = vpack.c.b16 %v434, %v430
    %v643 = vpack.c.b16 %v435, %v431
    %v644 = vpack.c.b16 %v440, %v436
    %v645 = vpack.c.b16 %v441, %v437
    %v646 = vpack.c.b16 %v442, %v438
    %v647 = vpack.c.b16 %v443, %v439
    %v648 = vpack.c.b16 %v448, %v444
    %v649 = vpack.c.b16 %v449, %v445
    %v650 = vpack.c.b16 %v450, %v446
    %v651 = vpack.c.b16 %v451, %v447
    %v652 = vpack.c.b16 %v456, %v452
    %v653 = vpack.c.b16 %v457, %v453
    %v654 = vpack.c.b16 %v458, %v454
    %v655 = vpack.c.b16 %v459, %v455
    %v656 = vpack.c.b16 %v464, %v460
    %v657 = vpack.c.b16 %v465, %v461
    %v658 = vpack.c.b16 %v466, %v462
    %v659 = vpack.c.b16 %v467, %v463
    %v660 = vpack.c.b16 %v472, %v468
    %v661 = vpack.c.b16 %v473, %v469
    %v662 = vpack.c.b16 %v474, %v470
    %v663 = vpack.c.b16 %v475, %v471
    %v664 = vpack.c.b16 %v480, %v476
    %v665 = vpack.c.b16 %v481, %v477
    %v666 = vpack.c.b16 %v482, %v478
    %v667 = vpack.c.b16 %v483, %v479
    %v668 = vpack.c.b16 %v488, %v484
    %v669 = vpack.c.b16 %v489, %v485
    %v670 = vpack.c.b16 %v490, %v486
    %v671 = vpack.c.b16 %v491, %v487
    %v672 = vpack.c.b16 %v496, %v492
    %v673 = vpack.c.b16 %v497, %v493
    %v674 = vpack.c.b16 %v498, %v494
    %v675 = vpack.c.b16 %v499, %v495
    %v676 = vpack.c.b16 %v504, %v500
    %v677 = vpack.c.b16 %v505, %v501
    %v678 = vpack.c.b16 %v506, %v502
    %v679 = vpack.c.b16 %v507, %v503
    %v680 = vpack.c.b16 %v512, %v508
    %v681 = vpack.c.b16 %v513, %v509
    %v682 = vpack.c.b16 %v514, %v510
    %v683 = vpack.c.b16 %v515, %v511
    %v684 = vpack.c.b16 %v520, %v516
    %v685 = vpack.c.b16 %v521, %v517
    %v686 = vpack.c.b16 %v522, %v518
    %v687 = vpack.c.b16 %v523, %v519
    %v688 = vpack.c.b16 %v528, %v524
    %v689 = vpack.c.b16 %v529, %v525
    %v690 = vpack.c.b16 %v530, %v526
    %v691 = vpack.c.b16 %v531, %v527
    %v692 = vpack.c.b16 %v536, %v532
    %v693 = vpack.c.b16 %v537, %v533
    %v694 = vpack.c.b16 %v538, %v534
    %v695 = vpack.c.b16 %v539, %v535
    %v696 = vpack.c.b16 %v544, %v540
    %v697 = vpack.c.b16 %v545, %v541
    %v698 = vpack.c.b16 %v546, %v542
    %v699 = vpack.c.b16 %v547, %v543
    %v700 = vpack.c.b16 %v552, %v548
    %v701 = vpack.c.b16 %v553, %v549
    %v702 = vpack.c.b16 %v554, %v550
    %v703 = vpack.c.b16 %v555, %v551
    %v704 = vpack.c.b16 %v560, %v556
    %v705 = vpack.c.b16 %v561, %v557
    %v706 = vpack.c.b16 %v562, %v558
    %v707 = vpack.c.b16 %v563, %v559
    %v708 = vpack.c.b16 %v568, %v564
    %v709 = vpack.c.b16 %v569, %v565
    %v710 = vpack.c.b16 %v570, %v566
    %v711 = vpack.c.b16 %v571, %v567
    %v712 = vpack.c.b16 %v576, %v572
    %v713 = vpack.c.b16 %v577, %v573
    %v714 = vpack.c.b16 %v578, %v574
    %v715 = vpack.c.b16 %v579, %v575
    %v716 = vpack.c.b16 %v584, %v580
    %v717 = vpack.c.b16 %v585, %v581
    %v718 = vpack.c.b16 %v586, %v582
    %v719 = vpack.c.b16 %v587, %v583
    %v720 = vpack.c.b16 %v592, %v588
    %v721 = vpack.c.b16 %v593, %v589
    %v722 = vpack.c.b16 %v594, %v590
    %v723 = vpack.c.b16 %v595, %v591
    %852 = vmatprep.subr.bf16.mxu0 %v625
    %853 = vmatpush1.bf16.msra.mxu0 %v624
    %854 = vmatprep.subr.bf16.mxu0 %v621
    %855 = vmatpush1.bf16.msra.mxu0 %v620
    %856 = vmatprep.subr.bf16.mxu0 %v617
    %857 = vmatpush1.bf16.msra.mxu0 %v616
    %858 = vmatprep.subr.bf16.mxu0 %v613
    %859 = vmatpush1.bf16.msra.mxu0 %v612
    %860 = vmatprep.subr.bf16.mxu0 %v609
    %861 = vmatpush1.bf16.msra.mxu0 %v608
    %862 = vmatprep.subr.bf16.mxu0 %v605
    %863 = vmatpush1.bf16.msra.mxu0 %v604
    %864 = vmatprep.subr.bf16.mxu0 %v601
    %865 = vmatpush1.bf16.msra.mxu0 %v600
    %866 = vmatprep.subr.bf16.mxu0 %v597
    %867 = vmatpush1.bf16.msra.mxu0 %v596
    %868 = vmatprep.subr.bf16.mxu0 %v657
    %869 = vmatpush2.bf16.msra.mxu0 %v656
    %870 = vmatprep.subr.bf16.mxu0 %v653
    %871 = vmatpush2.bf16.msra.mxu0 %v652
    %872 = vmatprep.subr.bf16.mxu0 %v649
    %873 = vmatpush2.bf16.msra.mxu0 %v648
    %874 = vmatprep.subr.bf16.mxu0 %v645
    %875 = vmatpush2.bf16.msra.mxu0 %v644
    %876 = vmatprep.subr.bf16.mxu0 %v641
    %877 = vmatpush2.bf16.msra.mxu0 %v640
    %878 = vmatprep.subr.bf16.mxu0 %v637
    %879 = vmatpush2.bf16.msra.mxu0 %v636
    %880 = vmatprep.subr.bf16.mxu0 %v633
    %881 = vmatpush2.bf16.msra.mxu0 %v632
    %882 = vmatprep.subr.bf16.mxu0 %v629
    %883 = vmatpush2.bf16.msra.mxu0 %v628
    %884 = vmatprep.mubr.bf16.mxu0 %v81
    %885 = vmatmul.mubr.bf16.gmra.mxu0 %v80
    %v886 = vpop.f32.mrf.mxu0
    %v887 = vadd.f32 0.0, %v886
    %v888 = vpop.f32.mrf.mxu0
    %v889 = vadd.f32 0.0, %v888
    %v890 = vpop.f32.mrf.mxu0
    %v891 = vadd.f32 0.0, %v890
    %v892 = vpop.f32.mrf.mxu0
    %v893 = vadd.f32 0.0, %v892
    %894 = vdwg.mxu0
    %895 = vmatprep.subr.bf16.mxu0 %v689
    %896 = vmatpush1.bf16.msra.mxu0 %v688
    %897 = vmatprep.subr.bf16.mxu0 %v685
    %898 = vmatpush1.bf16.msra.mxu0 %v684
    %899 = vmatprep.subr.bf16.mxu0 %v681
    %900 = vmatpush1.bf16.msra.mxu0 %v680
    %901 = vmatprep.subr.bf16.mxu0 %v677
    %902 = vmatpush1.bf16.msra.mxu0 %v676
    %903 = vmatprep.subr.bf16.mxu0 %v673
    %904 = vmatpush1.bf16.msra.mxu0 %v672
    %905 = vmatprep.subr.bf16.mxu0 %v669
    %906 = vmatpush1.bf16.msra.mxu0 %v668
    %907 = vmatprep.subr.bf16.mxu0 %v665
    %908 = vmatpush1.bf16.msra.mxu0 %v664
    %909 = vmatprep.subr.bf16.mxu0 %v661
    %910 = vmatpush1.bf16.msra.mxu0 %v660
    %911 = vmatprep.subr.bf16.mxu0 %v721
    %912 = vmatpush2.bf16.msra.mxu0 %v720
    %913 = vmatprep.subr.bf16.mxu0 %v717
    %914 = vmatpush2.bf16.msra.mxu0 %v716
    %915 = vmatprep.subr.bf16.mxu0 %v713
    %916 = vmatpush2.bf16.msra.mxu0 %v712
    %917 = vmatprep.subr.bf16.mxu0 %v709
    %918 = vmatpush2.bf16.msra.mxu0 %v708
    %919 = vmatprep.subr.bf16.mxu0 %v705
    %920 = vmatpush2.bf16.msra.mxu0 %v704
    %921 = vmatprep.subr.bf16.mxu0 %v701
    %922 = vmatpush2.bf16.msra.mxu0 %v700
    %923 = vmatprep.subr.bf16.mxu0 %v697
    %924 = vmatpush2.bf16.msra.mxu0 %v696
    %925 = vmatprep.subr.bf16.mxu0 %v693
    %926 = vmatpush2.bf16.msra.mxu0 %v692
    %927 = vmatprep.mubr.bf16.mxu0 %v83
    %928 = vmatmul.mubr.bf16.gmra.mxu0 %v82
    %v929 = vpop.f32.mrf.mxu0
    %v930 = vadd.f32 %v887, %v929
    %v931 = vpop.f32.mrf.mxu0
    %v932 = vadd.f32 %v889, %v931
    %v933 = vpop.f32.mrf.mxu0
    %v934 = vadd.f32 %v891, %v933
    %v935 = vpop.f32.mrf.mxu0
    %v936 = vadd.f32 %v893, %v935
    %937 = vdwg.mxu0
    %938 = vmatprep.subr.bf16.mxu0 %v627
    %939 = vmatpush1.bf16.msra.mxu0 %v626
    %940 = vmatprep.subr.bf16.mxu0 %v623
    %941 = vmatpush1.bf16.msra.mxu0 %v622
    %942 = vmatprep.subr.bf16.mxu0 %v619
    %943 = vmatpush1.bf16.msra.mxu0 %v618
    %944 = vmatprep.subr.bf16.mxu0 %v615
    %945 = vmatpush1.bf16.msra.mxu0 %v614
    %946 = vmatprep.subr.bf16.mxu0 %v611
    %947 = vmatpush1.bf16.msra.mxu0 %v610
    %948 = vmatprep.subr.bf16.mxu0 %v607
    %949 = vmatpush1.bf16.msra.mxu0 %v606
    %950 = vmatprep.subr.bf16.mxu0 %v603
    %951 = vmatpush1.bf16.msra.mxu0 %v602
    %952 = vmatprep.subr.bf16.mxu0 %v599
    %953 = vmatpush1.bf16.msra.mxu0 %v598
    %954 = vmatprep.subr.bf16.mxu0 %v659
    %955 = vmatpush2.bf16.msra.mxu0 %v658
    %956 = vmatprep.subr.bf16.mxu0 %v655
    %957 = vmatpush2.bf16.msra.mxu0 %v654
    %958 = vmatprep.subr.bf16.mxu0 %v651
    %959 = vmatpush2.bf16.msra.mxu0 %v650
    %960 = vmatprep.subr.bf16.mxu0 %v647
    %961 = vmatpush2.bf16.msra.mxu0 %v646
    %962 = vmatprep.subr.bf16.mxu0 %v643
    %963 = vmatpush2.bf16.msra.mxu0 %v642
    %964 = vmatprep.subr.bf16.mxu0 %v639
    %965 = vmatpush2.bf16.msra.mxu0 %v638
    %966 = vmatprep.subr.bf16.mxu0 %v635
    %967 = vmatpush2.bf16.msra.mxu0 %v634
    %968 = vmatprep.subr.bf16.mxu0 %v631
    %969 = vmatpush2.bf16.msra.mxu0 %v630
    %970 = vmatprep.mubr.bf16.mxu0 %v81
    %971 = vmatmul.mubr.bf16.gmra.mxu0 %v80
    %v972 = vpop.f32.mrf.mxu0
    %v973 = vadd.f32 0.0, %v972
    %v974 = vpop.f32.mrf.mxu0
    %v975 = vadd.f32 0.0, %v974
    %v976 = vpop.f32.mrf.mxu0
    %v977 = vadd.f32 0.0, %v976
    %v978 = vpop.f32.mrf.mxu0
    %v979 = vadd.f32 0.0, %v978
    %980 = vdwg.mxu0
    %981 = vmatprep.subr.bf16.mxu0 %v691
    %982 = vmatpush1.bf16.msra.mxu0 %v690
    %983 = vmatprep.subr.bf16.mxu0 %v687
    %984 = vmatpush1.bf16.msra.mxu0 %v686
    %985 = vmatprep.subr.bf16.mxu0 %v683
    %986 = vmatpush1.bf16.msra.mxu0 %v682
    %987 = vmatprep.subr.bf16.mxu0 %v679
    %988 = vmatpush1.bf16.msra.mxu0 %v678
    %989 = vmatprep.subr.bf16.mxu0 %v675
    %990 = vmatpush1.bf16.msra.mxu0 %v674
    %991 = vmatprep.subr.bf16.mxu0 %v671
    %992 = vmatpush1.bf16.msra.mxu0 %v670
    %993 = vmatprep.subr.bf16.mxu0 %v667
    %994 = vmatpush1.bf16.msra.mxu0 %v666
    %995 = vmatprep.subr.bf16.mxu0 %v663
    %996 = vmatpush1.bf16.msra.mxu0 %v662
    %997 = vmatprep.subr.bf16.mxu0 %v723
    %998 = vmatpush2.bf16.msra.mxu0 %v722
    %999 = vmatprep.subr.bf16.mxu0 %v719
    %1000 = vmatpush2.bf16.msra.mxu0 %v718
    %1001 = vmatprep.subr.bf16.mxu0 %v715
    %1002 = vmatpush2.bf16.msra.mxu0 %v714
    %1003 = vmatprep.subr.bf16.mxu0 %v711
    %1004 = vmatpush2.bf16.msra.mxu0 %v710
    %1005 = vmatprep.subr.bf16.mxu0 %v707
    %1006 = vmatpush2.bf16.msra.mxu0 %v706
    %1007 = vmatprep.subr.bf16.mxu0 %v703
    %1008 = vmatpush2.bf16.msra.mxu0 %v702
    %1009 = vmatprep.subr.bf16.mxu0 %v699
    %1010 = vmatpush2.bf16.msra.mxu0 %v698
    %1011 = vmatprep.subr.bf16.mxu0 %v695
    %1012 = vmatpush2.bf16.msra.mxu0 %v694
    %1013 = vmatprep.mubr.bf16.mxu0 %v83
    %1014 = vmatmul.mubr.bf16.gmra.mxu0 %v82
    %v1015 = vpop.f32.mrf.mxu0
    %v1016 = vadd.f32 %v973, %v1015
    %v1017 = vpop.f32.mrf.mxu0
    %v1018 = vadd.f32 %v975, %v1017
    %v1019 = vpop.f32.mrf.mxu0
    %v1020 = vadd.f32 %v977, %v1019
    %v1021 = vpop.f32.mrf.mxu0
    %v1022 = vadd.f32 %v979, %v1021
    %1023 = vdwg.mxu0
    %v1024 = vmax.f32 %v930, 0.0
    %v1025 = vmax.f32 %v932, 0.0
    %v1026 = vmax.f32 %v1016, 0.0
    %v1027 = vmax.f32 %v1018, 0.0
    %v1028 = vmax.f32 %v934, 0.0
    %v1029 = vmax.f32 %v936, 0.0
    %v1030 = vmax.f32 %v1020, 0.0
    %v1031 = vmax.f32 %v1022, 0.0
    %v1032 = vpack.c.bf16 %v1028, %v1024
    %v1033 = vpack.c.bf16 %v1029, %v1025
    %v1034 = vpack.c.bf16 %v1030, %v1026
    %v1035 = vpack.c.bf16 %v1031, %v1027
    %v1036 = vld [vmem:[#allocation6] sm:$0xff]
    %v1037 = vld [vmem:[#allocation6 + $0x8] sm:$0xff]
    %v1038 = vld [vmem:[#allocation6 + $0x10] sm:$0xff]
    %v1039 = vld [vmem:[#allocation6 + $0x18] sm:$0xff]
    %v1040 = vld [vmem:[#allocation6 + $0x20] sm:$0xff]
    %v1041 = vld [vmem:[#allocation6 + $0x28] sm:$0xff]
    %v1042 = vld [vmem:[#allocation6 + $0x30] sm:$0xff]
    %v1043 = vld [vmem:[#allocation6 + $0x38] sm:$0xff]
    %v1044 = vld [vmem:[#allocation6 + $0x40] sm:$0xff]
    %v1045 = vld [vmem:[#allocation6 + $0x48] sm:$0xff]
    %v1046 = vld [vmem:[#allocation6 + $0x50] sm:$0xff]
    %v1047 = vld [vmem:[#allocation6 + $0x58] sm:$0xff]
    %v1048 = vld [vmem:[#allocation6 + $0x60] sm:$0xff]
    %v1049 = vld [vmem:[#allocation6 + $0x68] sm:$0xff]
    %v1050 = vld [vmem:[#allocation6 + $0x70] sm:$0xff]
    %v1051 = vld [vmem:[#allocation6 + $0x78] sm:$0xff]
    %v1052 = vld [vmem:[#allocation6 + $0x80] sm:$0xff]
    %v1053 = vld [vmem:[#allocation6 + $0x88] sm:$0xff]
    %v1054 = vld [vmem:[#allocation6 + $0x90] sm:$0xff]
    %v1055 = vld [vmem:[#allocation6 + $0x98] sm:$0xff]
    %v1056 = vld [vmem:[#allocation6 + $0xa0] sm:$0xff]
    %v1057 = vld [vmem:[#allocation6 + $0xa8] sm:$0xff]
    %v1058 = vld [vmem:[#allocation6 + $0xb0] sm:$0xff]
    %v1059 = vld [vmem:[#allocation6 + $0xb8] sm:$0xff]
    %v1060 = vld [vmem:[#allocation6 + $0xc0] sm:$0xff]
    %v1061 = vld [vmem:[#allocation6 + $0xc8] sm:$0xff]
    %v1062 = vld [vmem:[#allocation6 + $0xd0] sm:$0xff]
    %v1063 = vld [vmem:[#allocation6 + $0xd8] sm:$0xff]
    %v1064 = vld [vmem:[#allocation6 + $0xe0] sm:$0xff]
    %v1065 = vld [vmem:[#allocation6 + $0xe8] sm:$0xff]
    %v1066 = vld [vmem:[#allocation6 + $0xf0] sm:$0xff]
    %v1067 = vld [vmem:[#allocation6 + $0xf8] sm:$0xff]
    %v1068 = vld [vmem:[#allocation6 + $0x100] sm:$0xff]
    %v1069 = vld [vmem:[#allocation6 + $0x108] sm:$0xff]
    %v1070 = vld [vmem:[#allocation6 + $0x110] sm:$0xff]
    %v1071 = vld [vmem:[#allocation6 + $0x118] sm:$0xff]
    %v1072 = vld [vmem:[#allocation6 + $0x120] sm:$0xff]
    %v1073 = vld [vmem:[#allocation6 + $0x128] sm:$0xff]
    %v1074 = vld [vmem:[#allocation6 + $0x130] sm:$0xff]
    %v1075 = vld [vmem:[#allocation6 + $0x138] sm:$0xff]
    %v1076 = vld [vmem:[#allocation6 + $0x140] sm:$0xff]
    %v1077 = vld [vmem:[#allocation6 + $0x148] sm:$0xff]
    %v1078 = vld [vmem:[#allocation6 + $0x150] sm:$0xff]
    %v1079 = vld [vmem:[#allocation6 + $0x158] sm:$0xff]
    %v1080 = vld [vmem:[#allocation6 + $0x160] sm:$0xff]
    %v1081 = vld [vmem:[#allocation6 + $0x168] sm:$0xff]
    %v1082 = vld [vmem:[#allocation6 + $0x170] sm:$0xff]
    %v1083 = vld [vmem:[#allocation6 + $0x178] sm:$0xff]
    %v1084 = vld [vmem:[#allocation6 + $0x180] sm:$0xff]
    %v1085 = vld [vmem:[#allocation6 + $0x188] sm:$0xff]
    %v1086 = vld [vmem:[#allocation6 + $0x190] sm:$0xff]
    %v1087 = vld [vmem:[#allocation6 + $0x198] sm:$0xff]
    %v1088 = vld [vmem:[#allocation6 + $0x1a0] sm:$0xff]
    %v1089 = vld [vmem:[#allocation6 + $0x1a8] sm:$0xff]
    %v1090 = vld [vmem:[#allocation6 + $0x1b0] sm:$0xff]
    %v1091 = vld [vmem:[#allocation6 + $0x1b8] sm:$0xff]
    %v1092 = vld [vmem:[#allocation6 + $0x1c0] sm:$0xff]
    %v1093 = vld [vmem:[#allocation6 + $0x1c8] sm:$0xff]
    %v1094 = vld [vmem:[#allocation6 + $0x1d0] sm:$0xff]
    %v1095 = vld [vmem:[#allocation6 + $0x1d8] sm:$0xff]
    %v1096 = vld [vmem:[#allocation6 + $0x1e0] sm:$0xff]
    %v1097 = vld [vmem:[#allocation6 + $0x1e8] sm:$0xff]
    %v1098 = vld [vmem:[#allocation6 + $0x1f0] sm:$0xff]
    %v1099 = vld [vmem:[#allocation6 + $0x1f8] sm:$0xff]
    %v1164 = vunpack.c.l.b16 %v1036
    %v1165 = vunpack.c.h.b16 %v1036
    %v1166 = vunpack.c.l.b16 %v1037
    %v1167 = vunpack.c.h.b16 %v1037
    %v1168 = vunpack.c.l.b16 %v1038
    %v1169 = vunpack.c.h.b16 %v1038
    %v1170 = vunpack.c.l.b16 %v1039
    %v1171 = vunpack.c.h.b16 %v1039
    %v1172 = vunpack.c.l.b16 %v1040
    %v1173 = vunpack.c.h.b16 %v1040
    %v1174 = vunpack.c.l.b16 %v1041
    %v1175 = vunpack.c.h.b16 %v1041
    %v1176 = vunpack.c.l.b16 %v1042
    %v1177 = vunpack.c.h.b16 %v1042
    %v1178 = vunpack.c.l.b16 %v1043
    %v1179 = vunpack.c.h.b16 %v1043
    %v1180 = vunpack.c.l.b16 %v1044
    %v1181 = vunpack.c.h.b16 %v1044
    %v1182 = vunpack.c.l.b16 %v1045
    %v1183 = vunpack.c.h.b16 %v1045
    %v1184 = vunpack.c.l.b16 %v1046
    %v1185 = vunpack.c.h.b16 %v1046
    %v1186 = vunpack.c.l.b16 %v1047
    %v1187 = vunpack.c.h.b16 %v1047
    %v1188 = vunpack.c.l.b16 %v1048
    %v1189 = vunpack.c.h.b16 %v1048
    %v1190 = vunpack.c.l.b16 %v1049
    %v1191 = vunpack.c.h.b16 %v1049
    %v1192 = vunpack.c.l.b16 %v1050
    %v1193 = vunpack.c.h.b16 %v1050
    %v1194 = vunpack.c.l.b16 %v1051
    %v1195 = vunpack.c.h.b16 %v1051
    %v1196 = vunpack.c.l.b16 %v1052
    %v1197 = vunpack.c.h.b16 %v1052
    %v1198 = vunpack.c.l.b16 %v1053
    %v1199 = vunpack.c.h.b16 %v1053
    %v1200 = vunpack.c.l.b16 %v1054
    %v1201 = vunpack.c.h.b16 %v1054
    %v1202 = vunpack.c.l.b16 %v1055
    %v1203 = vunpack.c.h.b16 %v1055
    %v1204 = vunpack.c.l.b16 %v1056
    %v1205 = vunpack.c.h.b16 %v1056
    %v1206 = vunpack.c.l.b16 %v1057
    %v1207 = vunpack.c.h.b16 %v1057
    %v1208 = vunpack.c.l.b16 %v1058
    %v1209 = vunpack.c.h.b16 %v1058
    %v1210 = vunpack.c.l.b16 %v1059
    %v1211 = vunpack.c.h.b16 %v1059
    %v1212 = vunpack.c.l.b16 %v1060
    %v1213 = vunpack.c.h.b16 %v1060
    %v1214 = vunpack.c.l.b16 %v1061
    %v1215 = vunpack.c.h.b16 %v1061
    %v1216 = vunpack.c.l.b16 %v1062
    %v1217 = vunpack.c.h.b16 %v1062
    %v1218 = vunpack.c.l.b16 %v1063
    %v1219 = vunpack.c.h.b16 %v1063
    %v1220 = vunpack.c.l.b16 %v1064
    %v1221 = vunpack.c.h.b16 %v1064
    %v1222 = vunpack.c.l.b16 %v1065
    %v1223 = vunpack.c.h.b16 %v1065
    %v1224 = vunpack.c.l.b16 %v1066
    %v1225 = vunpack.c.h.b16 %v1066
    %v1226 = vunpack.c.l.b16 %v1067
    %v1227 = vunpack.c.h.b16 %v1067
    %v1228 = vunpack.c.l.b16 %v1068
    %v1229 = vunpack.c.h.b16 %v1068
    %v1230 = vunpack.c.l.b16 %v1069
    %v1231 = vunpack.c.h.b16 %v1069
    %v1232 = vunpack.c.l.b16 %v1070
    %v1233 = vunpack.c.h.b16 %v1070
    %v1234 = vunpack.c.l.b16 %v1071
    %v1235 = vunpack.c.h.b16 %v1071
    %v1236 = vunpack.c.l.b16 %v1072
    %v1237 = vunpack.c.h.b16 %v1072
    %v1238 = vunpack.c.l.b16 %v1073
    %v1239 = vunpack.c.h.b16 %v1073
    %v1240 = vunpack.c.l.b16 %v1074
    %v1241 = vunpack.c.h.b16 %v1074
    %v1242 = vunpack.c.l.b16 %v1075
    %v1243 = vunpack.c.h.b16 %v1075
    %v1244 = vunpack.c.l.b16 %v1076
    %v1245 = vunpack.c.h.b16 %v1076
    %v1246 = vunpack.c.l.b16 %v1077
    %v1247 = vunpack.c.h.b16 %v1077
    %v1248 = vunpack.c.l.b16 %v1078
    %v1249 = vunpack.c.h.b16 %v1078
    %v1250 = vunpack.c.l.b16 %v1079
    %v1251 = vunpack.c.h.b16 %v1079
    %v1252 = vunpack.c.l.b16 %v1080
    %v1253 = vunpack.c.h.b16 %v1080
    %v1254 = vunpack.c.l.b16 %v1081
    %v1255 = vunpack.c.h.b16 %v1081
    %v1256 = vunpack.c.l.b16 %v1082
    %v1257 = vunpack.c.h.b16 %v1082
    %v1258 = vunpack.c.l.b16 %v1083
    %v1259 = vunpack.c.h.b16 %v1083
    %v1260 = vunpack.c.l.b16 %v1084
    %v1261 = vunpack.c.h.b16 %v1084
    %v1262 = vunpack.c.l.b16 %v1085
    %v1263 = vunpack.c.h.b16 %v1085
    %v1264 = vunpack.c.l.b16 %v1086
    %v1265 = vunpack.c.h.b16 %v1086
    %v1266 = vunpack.c.l.b16 %v1087
    %v1267 = vunpack.c.h.b16 %v1087
    %v1268 = vunpack.c.l.b16 %v1088
    %v1269 = vunpack.c.h.b16 %v1088
    %v1270 = vunpack.c.l.b16 %v1089
    %v1271 = vunpack.c.h.b16 %v1089
    %v1272 = vunpack.c.l.b16 %v1090
    %v1273 = vunpack.c.h.b16 %v1090
    %v1274 = vunpack.c.l.b16 %v1091
    %v1275 = vunpack.c.h.b16 %v1091
    %v1276 = vunpack.c.l.b16 %v1092
    %v1277 = vunpack.c.h.b16 %v1092
    %v1278 = vunpack.c.l.b16 %v1093
    %v1279 = vunpack.c.h.b16 %v1093
    %v1280 = vunpack.c.l.b16 %v1094
    %v1281 = vunpack.c.h.b16 %v1094
    %v1282 = vunpack.c.l.b16 %v1095
    %v1283 = vunpack.c.h.b16 %v1095
    %v1284 = vunpack.c.l.b16 %v1096
    %v1285 = vunpack.c.h.b16 %v1096
    %v1286 = vunpack.c.l.b16 %v1097
    %v1287 = vunpack.c.h.b16 %v1097
    %v1288 = vunpack.c.l.b16 %v1098
    %v1289 = vunpack.c.h.b16 %v1098
    %v1290 = vunpack.c.l.b16 %v1099
    %v1291 = vunpack.c.h.b16 %v1099
    %v1292 = vpack.c.b16 %v1166, %v1164
    %v1293 = vpack.c.b16 %v1167, %v1165
    %v1294 = vpack.c.b16 %v1170, %v1168
    %v1295 = vpack.c.b16 %v1171, %v1169
    %v1296 = vpack.c.b16 %v1174, %v1172
    %v1297 = vpack.c.b16 %v1175, %v1173
    %v1298 = vpack.c.b16 %v1178, %v1176
    %v1299 = vpack.c.b16 %v1179, %v1177
    %v1300 = vpack.c.b16 %v1182, %v1180
    %v1301 = vpack.c.b16 %v1183, %v1181
    %v1302 = vpack.c.b16 %v1186, %v1184
    %v1303 = vpack.c.b16 %v1187, %v1185
    %v1304 = vpack.c.b16 %v1190, %v1188
    %v1305 = vpack.c.b16 %v1191, %v1189
    %v1306 = vpack.c.b16 %v1194, %v1192
    %v1307 = vpack.c.b16 %v1195, %v1193
    %v1308 = vpack.c.b16 %v1198, %v1196
    %v1309 = vpack.c.b16 %v1199, %v1197
    %v1310 = vpack.c.b16 %v1202, %v1200
    %v1311 = vpack.c.b16 %v1203, %v1201
    %v1312 = vpack.c.b16 %v1206, %v1204
    %v1313 = vpack.c.b16 %v1207, %v1205
    %v1314 = vpack.c.b16 %v1210, %v1208
    %v1315 = vpack.c.b16 %v1211, %v1209
    %v1316 = vpack.c.b16 %v1214, %v1212
    %v1317 = vpack.c.b16 %v1215, %v1213
    %v1318 = vpack.c.b16 %v1218, %v1216
    %v1319 = vpack.c.b16 %v1219, %v1217
    %v1320 = vpack.c.b16 %v1222, %v1220
    %v1321 = vpack.c.b16 %v1223, %v1221
    %v1322 = vpack.c.b16 %v1226, %v1224
    %v1323 = vpack.c.b16 %v1227, %v1225
    %v1324 = vpack.c.b16 %v1230, %v1228
    %v1325 = vpack.c.b16 %v1231, %v1229
    %v1326 = vpack.c.b16 %v1234, %v1232
    %v1327 = vpack.c.b16 %v1235, %v1233
    %v1328 = vpack.c.b16 %v1238, %v1236
    %v1329 = vpack.c.b16 %v1239, %v1237
    %v1330 = vpack.c.b16 %v1242, %v1240
    %v1331 = vpack.c.b16 %v1243, %v1241
    %v1332 = vpack.c.b16 %v1246, %v1244
    %v1333 = vpack.c.b16 %v1247, %v1245
    %v1334 = vpack.c.b16 %v1250, %v1248
    %v1335 = vpack.c.b16 %v1251, %v1249
    %v1336 = vpack.c.b16 %v1254, %v1252
    %v1337 = vpack.c.b16 %v1255, %v1253
    %v1338 = vpack.c.b16 %v1258, %v1256
    %v1339 = vpack.c.b16 %v1259, %v1257
    %v1340 = vpack.c.b16 %v1262, %v1260
    %v1341 = vpack.c.b16 %v1263, %v1261
    %v1342 = vpack.c.b16 %v1266, %v1264
    %v1343 = vpack.c.b16 %v1267, %v1265
    %v1344 = vpack.c.b16 %v1270, %v1268
    %v1345 = vpack.c.b16 %v1271, %v1269
    %v1346 = vpack.c.b16 %v1274, %v1272
    %v1347 = vpack.c.b16 %v1275, %v1273
    %v1348 = vpack.c.b16 %v1278, %v1276
    %v1349 = vpack.c.b16 %v1279, %v1277
    %v1350 = vpack.c.b16 %v1282, %v1280
    %v1351 = vpack.c.b16 %v1283, %v1281
    %v1352 = vpack.c.b16 %v1286, %v1284
    %v1353 = vpack.c.b16 %v1287, %v1285
    %v1354 = vpack.c.b16 %v1290, %v1288
    %v1355 = vpack.c.b16 %v1291, %v1289
    %1420 = vmatprep.subr.bf16.mxu0 %v1307
    %1421 = vmatpush1.bf16.msra.mxu0 %v1306
    %1422 = vmatprep.subr.bf16.mxu0 %v1305
    %1423 = vmatpush1.bf16.msra.mxu0 %v1304
    %1424 = vmatprep.subr.bf16.mxu0 %v1303
    %1425 = vmatpush1.bf16.msra.mxu0 %v1302
    %1426 = vmatprep.subr.bf16.mxu0 %v1301
    %1427 = vmatpush1.bf16.msra.mxu0 %v1300
    %1428 = vmatprep.subr.bf16.mxu0 %v1299
    %1429 = vmatpush1.bf16.msra.mxu0 %v1298
    %1430 = vmatprep.subr.bf16.mxu0 %v1297
    %1431 = vmatpush1.bf16.msra.mxu0 %v1296
    %1432 = vmatprep.subr.bf16.mxu0 %v1295
    %1433 = vmatpush1.bf16.msra.mxu0 %v1294
    %1434 = vmatprep.subr.bf16.mxu0 %v1293
    %1435 = vmatpush1.bf16.msra.mxu0 %v1292
    %1436 = vmatprep.subr.bf16.mxu0 %v1323
    %1437 = vmatpush2.bf16.msra.mxu0 %v1322
    %1438 = vmatprep.subr.bf16.mxu0 %v1321
    %1439 = vmatpush2.bf16.msra.mxu0 %v1320
    %1440 = vmatprep.subr.bf16.mxu0 %v1319
    %1441 = vmatpush2.bf16.msra.mxu0 %v1318
    %1442 = vmatprep.subr.bf16.mxu0 %v1317
    %1443 = vmatpush2.bf16.msra.mxu0 %v1316
    %1444 = vmatprep.subr.bf16.mxu0 %v1315
    %1445 = vmatpush2.bf16.msra.mxu0 %v1314
    %1446 = vmatprep.subr.bf16.mxu0 %v1313
    %1447 = vmatpush2.bf16.msra.mxu0 %v1312
    %1448 = vmatprep.subr.bf16.mxu0 %v1311
    %1449 = vmatpush2.bf16.msra.mxu0 %v1310
    %1450 = vmatprep.subr.bf16.mxu0 %v1309
    %1451 = vmatpush2.bf16.msra.mxu0 %v1308
    %1452 = vmatprep.mubr.bf16.mxu0 %v1033
    %1453 = vmatmul.mubr.bf16.gmra.mxu0 %v1032
    %v1454 = vpop.f32.mrf.mxu0
    %v1455 = vadd.f32 0.0, %v1454
    %v1456 = vpop.f32.mrf.mxu0
    %v1457 = vadd.f32 0.0, %v1456
    %v1458 = vpop.f32.mrf.mxu0
    %v1459 = vadd.f32 0.0, %v1458
    %v1460 = vpop.f32.mrf.mxu0
    %v1461 = vadd.f32 0.0, %v1460
    %1462 = vdwg.mxu0
    %1463 = vmatprep.subr.bf16.mxu0 %v1339
    %1464 = vmatpush1.bf16.msra.mxu0 %v1338
    %1465 = vmatprep.subr.bf16.mxu0 %v1337
    %1466 = vmatpush1.bf16.msra.mxu0 %v1336
    %1467 = vmatprep.subr.bf16.mxu0 %v1335
    %1468 = vmatpush1.bf16.msra.mxu0 %v1334
    %1469 = vmatprep.subr.bf16.mxu0 %v1333
    %1470 = vmatpush1.bf16.msra.mxu0 %v1332
    %1471 = vmatprep.subr.bf16.mxu0 %v1331
    %1472 = vmatpush1.bf16.msra.mxu0 %v1330
    %1473 = vmatprep.subr.bf16.mxu0 %v1329
    %1474 = vmatpush1.bf16.msra.mxu0 %v1328
    %1475 = vmatprep.subr.bf16.mxu0 %v1327
    %1476 = vmatpush1.bf16.msra.mxu0 %v1326
    %1477 = vmatprep.subr.bf16.mxu0 %v1325
    %1478 = vmatpush1.bf16.msra.mxu0 %v1324
    %1479 = vmatprep.subr.bf16.mxu0 %v1355
    %1480 = vmatpush2.bf16.msra.mxu0 %v1354
    %1481 = vmatprep.subr.bf16.mxu0 %v1353
    %1482 = vmatpush2.bf16.msra.mxu0 %v1352
    %1483 = vmatprep.subr.bf16.mxu0 %v1351
    %1484 = vmatpush2.bf16.msra.mxu0 %v1350
    %1485 = vmatprep.subr.bf16.mxu0 %v1349
    %1486 = vmatpush2.bf16.msra.mxu0 %v1348
    %1487 = vmatprep.subr.bf16.mxu0 %v1347
    %1488 = vmatpush2.bf16.msra.mxu0 %v1346
    %1489 = vmatprep.subr.bf16.mxu0 %v1345
    %1490 = vmatpush2.bf16.msra.mxu0 %v1344
    %1491 = vmatprep.subr.bf16.mxu0 %v1343
    %1492 = vmatpush2.bf16.msra.mxu0 %v1342
    %1493 = vmatprep.subr.bf16.mxu0 %v1341
    %1494 = vmatpush2.bf16.msra.mxu0 %v1340
    %1495 = vmatprep.mubr.bf16.mxu0 %v1035
    %1496 = vmatmul.mubr.bf16.gmra.mxu0 %v1034
    %v1497 = vpop.f32.mrf.mxu0
    %v1498 = vadd.f32 %v1455, %v1497
    %v1499 = vpop.f32.mrf.mxu0
    %v1500 = vadd.f32 %v1457, %v1499
    %v1501 = vpop.f32.mrf.mxu0
    %v1502 = vadd.f32 %v1459, %v1501
    %v1503 = vpop.f32.mrf.mxu0
    %v1504 = vadd.f32 %v1461, %v1503
    %1505 = vdwg.mxu0
    %v1506 = vmax.f32 %v1498, 0.0
    %v1507 = vmax.f32 %v1500, 0.0
    %v1508 = vmax.f32 %v1502, 0.0
    %v1509 = vmax.f32 %v1504, 0.0
    %v1510 = vld [vmem:[#allocation7] sm:$0xff]
    %v1511 = vld [vmem:[#allocation7 + $0x8] sm:$0xff]
    %v1512 = vld [vmem:[#allocation7 + $0x10] sm:$0xff]
    %v1513 = vld [vmem:[#allocation7 + $0x18] sm:$0xff]
    %v1514 = vld [vmem:[#allocation7 + $0x20] sm:$0xff]
    %v1515 = vld [vmem:[#allocation7 + $0x28] sm:$0xff]
    %v1516 = vld [vmem:[#allocation7 + $0x30] sm:$0xff]
    %v1517 = vld [vmem:[#allocation7 + $0x38] sm:$0xff]
    %v1518 = vld [vmem:[#allocation7 + $0x40] sm:$0xff]
    %v1519 = vld [vmem:[#allocation7 + $0x48] sm:$0xff]
    %v1520 = vld [vmem:[#allocation7 + $0x50] sm:$0xff]
    %v1521 = vld [vmem:[#allocation7 + $0x58] sm:$0xff]
    %v1522 = vld [vmem:[#allocation7 + $0x60] sm:$0xff]
    %v1523 = vld [vmem:[#allocation7 + $0x68] sm:$0xff]
    %v1524 = vld [vmem:[#allocation7 + $0x70] sm:$0xff]
    %v1525 = vld [vmem:[#allocation7 + $0x78] sm:$0xff]
    %v1526 = vld [vmem:[#allocation7 + $0x80] sm:$0xff]
    %v1527 = vld [vmem:[#allocation7 + $0x88] sm:$0xff]
    %v1528 = vld [vmem:[#allocation7 + $0x90] sm:$0xff]
    %v1529 = vld [vmem:[#allocation7 + $0x98] sm:$0xff]
    %v1530 = vld [vmem:[#allocation7 + $0xa0] sm:$0xff]
    %v1531 = vld [vmem:[#allocation7 + $0xa8] sm:$0xff]
    %v1532 = vld [vmem:[#allocation7 + $0xb0] sm:$0xff]
    %v1533 = vld [vmem:[#allocation7 + $0xb8] sm:$0xff]
    %v1534 = vld [vmem:[#allocation7 + $0xc0] sm:$0xff]
    %v1535 = vld [vmem:[#allocation7 + $0xc8] sm:$0xff]
    %v1536 = vld [vmem:[#allocation7 + $0xd0] sm:$0xff]
    %v1537 = vld [vmem:[#allocation7 + $0xd8] sm:$0xff]
    %v1538 = vld [vmem:[#allocation7 + $0xe0] sm:$0xff]
    %v1539 = vld [vmem:[#allocation7 + $0xe8] sm:$0xff]
    %v1540 = vld [vmem:[#allocation7 + $0xf0] sm:$0xff]
    %v1541 = vld [vmem:[#allocation7 + $0xf8] sm:$0xff]
    %1542 = vmatprep.subr.mxu0 0.0
    %1543 = vmatpush1.msra.mxu0 %v1525
    %1544 = vmatprep.subr.mxu0 0.0
    %1545 = vmatpush1.msra.mxu0 %v1524
    %1546 = vmatprep.subr.mxu0 0.0
    %1547 = vmatpush1.msra.mxu0 %v1523
    %1548 = vmatprep.subr.mxu0 0.0
    %1549 = vmatpush1.msra.mxu0 %v1522
    %1550 = vmatprep.subr.mxu0 0.0
    %1551 = vmatpush1.msra.mxu0 %v1521
    %1552 = vmatprep.subr.mxu0 0.0
    %1553 = vmatpush1.msra.mxu0 %v1520
    %1554 = vmatprep.subr.mxu0 0.0
    %1555 = vmatpush1.msra.mxu0 %v1519
    %1556 = vmatprep.subr.mxu0 0.0
    %1557 = vmatpush1.msra.mxu0 %v1518
    %1558 = vmatprep.subr.mxu0 0.0
    %1559 = vmatpush1.msra.mxu0 %v1517
    %1560 = vmatprep.subr.mxu0 0.0
    %1561 = vmatpush1.msra.mxu0 %v1516
    %1562 = vmatprep.subr.mxu0 0.0
    %1563 = vmatpush1.msra.mxu0 %v1515
    %1564 = vmatprep.subr.mxu0 0.0
    %1565 = vmatpush1.msra.mxu0 %v1514
    %1566 = vmatprep.subr.mxu0 0.0
    %1567 = vmatpush1.msra.mxu0 %v1513
    %1568 = vmatprep.subr.mxu0 0.0
    %1569 = vmatpush1.msra.mxu0 %v1512
    %1570 = vmatprep.subr.mxu0 0.0
    %1571 = vmatpush1.msra.mxu0 %v1511
    %1572 = vmatprep.subr.mxu0 0.0
    %1573 = vmatpush1.msra.mxu0 %v1510
    %1574 = vmatprep.subr.mxu0 0.0
    %1575 = vmatpush2.msra.mxu0 %v1541
    %1576 = vmatprep.subr.mxu0 0.0
    %1577 = vmatpush2.msra.mxu0 %v1540
    %1578 = vmatprep.subr.mxu0 0.0
    %1579 = vmatpush2.msra.mxu0 %v1539
    %1580 = vmatprep.subr.mxu0 0.0
    %1581 = vmatpush2.msra.mxu0 %v1538
    %1582 = vmatprep.subr.mxu0 0.0
    %1583 = vmatpush2.msra.mxu0 %v1537
    %1584 = vmatprep.subr.mxu0 0.0
    %1585 = vmatpush2.msra.mxu0 %v1536
    %1586 = vmatprep.subr.mxu0 0.0
    %1587 = vmatpush2.msra.mxu0 %v1535
    %1588 = vmatprep.subr.mxu0 0.0
    %1589 = vmatpush2.msra.mxu0 %v1534
    %1590 = vmatprep.subr.mxu0 0.0
    %1591 = vmatpush2.msra.mxu0 %v1533
    %1592 = vmatprep.subr.mxu0 0.0
    %1593 = vmatpush2.msra.mxu0 %v1532
    %1594 = vmatprep.subr.mxu0 0.0
    %1595 = vmatpush2.msra.mxu0 %v1531
    %1596 = vmatprep.subr.mxu0 0.0
    %1597 = vmatpush2.msra.mxu0 %v1530
    %1598 = vmatprep.subr.mxu0 0.0
    %1599 = vmatpush2.msra.mxu0 %v1529
    %1600 = vmatprep.subr.mxu0 0.0
    %1601 = vmatpush2.msra.mxu0 %v1528
    %1602 = vmatprep.subr.mxu0 0.0
    %1603 = vmatpush2.msra.mxu0 %v1527
    %1604 = vmatprep.subr.mxu0 0.0
    %1605 = vmatpush2.msra.mxu0 %v1526
    %1606 = vmatprep.mubr.f32.mxu0 %v1507
    %1607 = vmatmul.mubr.f32.gmra.mxu0 %v1506
    %v1608 = vpop.f32.mrf.mxu0
    %v1609 = vadd.f32 0.0, %v1608
    %v1610 = vpop.f32.mrf.mxu0
    %1611 = vmatprep.mubr.f32.mxu0 %v1509
    %1612 = vmatmul.mubr.f32.gmra.mxu0 %v1508
    %v1613 = vpop.f32.mrf.mxu0
    %v1614 = vadd.f32 0.0, %v1613
    %v1615 = vpop.f32.mrf.mxu0
    %1616 = vdwg.mxu0
    %1617 = vst [vmem:[%s4] sm:$0xff] %v1609
    %1618 = vst [vmem:[%s4 + $0x8] sm:$0xff] %v1614
    // Predicated region
    $region34: #{race_branch_forward.1} parent=1 // pred_check
      _
    $region35: #{race_branch_forward.1} parent=1 // pred_check_branch
      %1620 = sbr.rel (0) target = $region37
    $region36: #{race_branch_forward.1} parent=1 // pred_region
      _
    $region37: #{race_branch_forward.1} parent=1 // pred_fallthru
      _
    // Predicated region
    $region38: #{race_branch_forward.1} parent=1 // pred_check
      _
    $region39: #{race_branch_forward.1} parent=1 // pred_check_branch
      %1622 = sbr.rel (0) target = $region41
    $region40: #{race_branch_forward.1} parent=1 // pred_region
      _
    $region41: #{race_branch_forward.1} parent=1 // pred_fallthru
      _
    %1623 = vsyncpa [#allocation3], 1
    %1624 = vsyncpa [#allocation5], 1
    %1625 = vsyncpa [#allocation8], 1

</llo_original>
